<compile_context>
chip_gen: v7x
topology: tpu7x:2x2x1
jax: 0.10.0
libtpu: 0.0.40
codegen_flags: <defaults>
</compile_context>

<pallas_src>
import numpy as np
import jax
import jax.numpy as jnp
from jax.experimental import pallas as pl
from jax.experimental.pallas import tpu as pltpu

LANE = 128      # lane width: pad the flattened spatial dim to a multiple of this
SUBLANE = 8     # sublane width: pad the channel dim of the "sums" view to a multiple of this


# ----------------------------------------------------------------------------
# Parameter-only glue (host, float64): stacked solve operator + row sums.
# ----------------------------------------------------------------------------
def lattice_edges(image_height, image_width):
    mat_is, mat_js = np.meshgrid(range(image_height), range(image_width))
    centers = np.vstack((mat_is.flatten(), mat_js.flatten())).T
    adjacency = np.array(((0, -1), (0, +1), (-1, 0), (+1, 0)))
    neighbors = (centers[:, None, :] + adjacency).reshape(-1, 2)
    i_valid = (
        (neighbors[:, 0] >= 0) * (neighbors[:, 0] < image_height)
        * (neighbors[:, 1] >= 0) * (neighbors[:, 1] < image_width)
    )
    edges_center = centers.repeat(len(adjacency), axis=0)[i_valid].dot((image_width, 1))
    edges_neighbor = neighbors[i_valid].dot((image_width, 1))
    return edges_center, edges_neighbor


def build_poisson_operator(log_resistances, weights):
    """log_resistances: (C, H, W) f64; weights: (C,).

    Returns:
      m_stack : (C*Npad, Npad) f64, rows [c*Npad : c*Npad+N] = (weights[c]*inv(Z_c+1)).T,
                zero-padded so the lane (output) dim is a multiple of 128.
      row_sums: (C, Npad) f64, row_sums[c, :N] = (weights[c]*inv(Z_c+1)).sum(axis=1)
                (rank-1 mean-correction vector).
      zmats   : (C, N, N) f64 system matrices (only used for the float64 reference).
    """
    C, H, W = log_resistances.shape
    N = H * W
    n_pad = -(-N // LANE) * LANE
    ec, en = lattice_edges(H, W)
    m_stack = np.zeros((C * n_pad, n_pad), dtype=np.float64)
    row_sums = np.zeros((C, n_pad), dtype=np.float64)
    zmats = np.zeros((C, N, N), dtype=np.float64)
    for c in range(C):
        cond = np.exp(log_resistances[c].astype(np.float64).reshape(-1))
        off = np.zeros((N, N), dtype=np.float64)
        np.add.at(off, (ec, en), cond[ec] + cond[en])
        zmat = np.diag(off.sum(axis=1)) - off
        zmats[c] = zmat
        wm = float(weights[c]) * np.linalg.inv(zmat + 1.0)   # y_c = wm @ x_c_centered
        m_stack[c * n_pad : c * n_pad + N, :N] = wm.T
        row_sums[c, :N] = wm.sum(axis=1)
    return m_stack, row_sums, zmats


# ----------------------------------------------------------------------------
# Pallas kernel: one fused (B, C*Npad) x (C*Npad, Npad) matmul, K-tiled over channel groups.
# ----------------------------------------------------------------------------
def poisson_fused_kernel(scal_ref, x2_ref, x3_ref, m_ref, r_ref, out_ref):
    """scal_ref: (2,) SMEM        -> [bias, 1/(B*N_true)]
       x2_ref  : (B, kt) VMEM     -> current K-tile of x, NCHW-flattened (stacked contraction)
       x3_ref  : (B, Cp, Npad)    -> full x, 3-D view (channel dim padded to 8), resident
       m_ref   : (kt, Npad)       -> current K-tile of the stacked operator M_stack
       r_ref   : (Cp, Npad)       -> per-channel row sums (mean correction), resident
       out_ref : (B, Npad)        -> resident accumulator across the K grid axis
    """
    k = pl.program_id(0)

    @pl.when(k == 0)
    def _init():
        # bias + rank-1 mean correction, computed once from the resident x3 / r blocks:
        #   out -= sum_c mean_c * r_c,   mean_c = (1/(B*N)) * sum_{b,i} x[b, c, i]
        ch_sums = jnp.sum(x3_ref[...], axis=2)                      # (B, Cp)
        per_b = jnp.dot(ch_sums, r_ref[...],
                        preferred_element_type=jnp.float32)         # (B, Npad)
        corr = jnp.sum(per_b, axis=0, keepdims=True) * scal_ref[1]  # (1, Npad)
        out_ref[...] = jnp.broadcast_to(scal_ref[0] - corr, out_ref.shape)

    # One long-K contraction per channel-group tile: (B, kt) @ (kt, Npad) on the MXU.
    out_ref[...] += jnp.dot(x2_ref[...], m_ref[...],
                            preferred_element_type=jnp.float32)


def solve_poisson_tensor(x_nchw, m_stack, row_sums, bias, *,
                         vmem_budget_bytes=12 * 1024 * 1024):
    """x_nchw: (B, C, H, W); m_stack: (C*Npad, Npad); row_sums: (C, Npad); bias scalar.
    Returns (B, H, W) float32."""
    B, C, H, W = x_nchw.shape
    N = H * W
    cnp, n_pad = m_stack.shape
    assert cnp == C * n_pad and row_sums.shape == (C, n_pad)

    # x: free reshape of NCHW (no transpose); zero-pad spatial dim to the lane multiple.
    x3 = x_nchw.reshape(B, C, N).astype(jnp.float32)
    if n_pad != N:
        x3 = jnp.pad(x3, ((0, 0), (0, 0), (0, n_pad - N)))
    x2 = x3.reshape(B, C * n_pad)                                   # matmul view
    c_pad = -(-C // SUBLANE) * SUBLANE                              # sums view: pad channels to 8
    x3s = x3 if c_pad == C else jnp.pad(x3, ((0, 0), (0, c_pad - C), (0, 0)))

    m_stack = m_stack.astype(jnp.float32)
    row_sums = row_sums.astype(jnp.float32)
    r_pad = row_sums if c_pad == C else jnp.pad(row_sums, ((0, c_pad - C), (0, 0)))
    scalars = jnp.array([bias, 1.0 / (B * N)], dtype=jnp.float32)

    # Channel-group K-tiling: one grid step whenever M_stack fits the per-block VMEM budget
    # (true at these sizes); otherwise tile so a double-buffered M block stays in VMEM on v7x.
    max_cg = max(1, vmem_budget_bytes // (n_pad * n_pad * 4))
    cg = 1
    for d in range(1, C + 1):
        if C % d == 0 and d <= max_cg:
            cg = d
    num_groups = C // cg
    kt = cg * n_pad

    cost = pl.CostEstimate(
        flops=2 * B * C * n_pad * n_pad + 2 * B * c_pad * n_pad,
        transcendentals=0,
        bytes_accessed=4 * (C * n_pad * n_pad + B * C * n_pad
                            + B * c_pad * n_pad + c_pad * n_pad + B * n_pad),
    )

    out = pl.pallas_call(
        poisson_fused_kernel,
        out_shape=jax.ShapeDtypeStruct((B, n_pad), jnp.float32),
        grid_spec=pltpu.PrefetchScalarGridSpec(
            num_scalar_prefetch=0,
            grid=(num_groups,),
            in_specs=[
                pl.BlockSpec(memory_space=pltpu.MemorySpace.SMEM),        # [bias, 1/(B*N)]
                pl.BlockSpec((B, kt), lambda k: (0, k)),                  # x (2-D) K-tile
                pl.BlockSpec((B, c_pad, n_pad), lambda k: (0, 0, 0)),     # x (3-D), resident
                pl.BlockSpec((kt, n_pad), lambda k: (k, 0)),              # M_stack K-tile
                pl.BlockSpec((c_pad, n_pad), lambda k: (0, 0)),           # row sums, resident
            ],
            out_specs=pl.BlockSpec((B, n_pad), lambda k: (0, 0)),         # resident accumulator
        ),
        compiler_params=pltpu.CompilerParams(
            # Reduction (K) axis feeding a resident accumulator: must stay "arbitrary".
            # TODO(synk): for large N, add a parallel output-N grid axis for v7x megacore.
            dimension_semantics=("arbitrary",),
            vmem_limit_bytes=32 * 1024 * 1024,
        ),
        cost_estimate=cost,
    )(scalars, x2, x3s, m_stack, r_pad)

    return out[:, :N].reshape(B, H, W)


if __name__ == "__main__":
    B, C, H, W = 2, 4, 16, 16
    N = H * W
    key = jax.random.PRNGKey(0)
    k_params, k_x = jax.random.split(key)

    # Parameters as in SolvePoissonTensor.__init__: per-plane log_resistances ~ U(0,1),
    # weights = ones(C), bias = 0.
    log_resistances = np.asarray(
        jax.random.uniform(k_params, (C, H, W), dtype=jnp.float32), dtype=np.float64
    )
    weights = np.ones((C,), dtype=np.float64)
    bias = 0.0

    m_stack, row_sums, zmats = build_poisson_operator(log_resistances, weights)
    x = jax.random.normal(k_x, (B, C, H, W), dtype=jnp.float32)

    y = solve_poisson_tensor(
        x,
        jnp.asarray(m_stack, dtype=jnp.float32),
        jnp.asarray(row_sums, dtype=jnp.float32),
        bias,
    )
    y = jax.block_until_ready(y)

    # Float64 reference reproducing the PyTorch module math (per-channel centered solve).
    xn = np.asarray(x, dtype=np.float64)
    ref = np.full((B, N), float(bias), dtype=np.float64)
    for c in range(C):
        xc = xn[:, c].reshape(B, N)
        xc = xc - xc.mean()
        yc = np.linalg.solve(zmats[c] + 1.0, xc.T).T
        ref += weights[c] * yc
    ref = ref.reshape(B, H, W)

    assert y.shape == (B, H, W) and y.dtype == jnp.float32
    assert bool(jnp.all(jnp.isfinite(y)))
    err = float(np.max(np.abs(np.asarray(y, dtype=np.float64) - ref)))
    scale = max(1.0, float(np.max(np.abs(ref))))
    assert err <= 2e-3 * scale, f"max abs err {err} vs ref scale {scale}"
    print("KERNEL_OK")
</pallas_src>

<mosaic_0001>
module attributes {stable_mosaic.version = 11 : i64} {
  func.func @poisson_fused_kernel(%arg0: i32, %arg1: memref<2xf32, #tpu.memory_space<smem>>, %arg2: memref<2x1024xf32, #tpu.memory_space<vmem>>, %arg3: memref<2x8x256xf32, #tpu.memory_space<vmem>>, %arg4: memref<1024x256xf32, #tpu.memory_space<vmem>>, %arg5: memref<8x256xf32, #tpu.memory_space<vmem>>, %arg6: memref<2x256xf32, #tpu.memory_space<vmem>>) attributes {dimension_semantics = [#tpu.dimension_semantics<arbitrary>], iteration_bounds = array<i64: 1>, scalar_prefetch = 0 : i64, scratch_operands = 0 : i64, tpu.core_type = #tpu.core_type<tc>, window_params = [{transform_indices = @transform_0, window_bounds = array<i64: 2>}, {transform_indices = @transform_1, window_bounds = array<i64: 2, 1024>}, {pipeline_mode = #tpu.pipeline_mode<synchronous>, transform_indices = @transform_2, window_bounds = array<i64: 2, 8, 256>}, {transform_indices = @transform_3, window_bounds = array<i64: 1024, 256>}, {pipeline_mode = #tpu.pipeline_mode<synchronous>, transform_indices = @transform_4, window_bounds = array<i64: 8, 256>}, {pipeline_mode = #tpu.pipeline_mode<synchronous>, transform_indices = @transform_5, window_bounds = array<i64: 2, 256>}]} {
    %c0_i32 = arith.constant 0 : i32
    %0 = arith.cmpi eq, %arg0, %c0_i32 : i32
    %1 = arith.extui %0 : i1 to i32
    %c0_i32_0 = arith.constant 0 : i32
    %2 = arith.cmpi ne, %1, %c0_i32_0 : i32
    scf.if %2 {
      %c0_8 = arith.constant 0 : index
      %c0_9 = arith.constant 0 : index
      %c0_10 = arith.constant 0 : index
      %9 = vector.load %arg3[%c0_8, %c0_9, %c0_10] : memref<2x8x256xf32, #tpu.memory_space<vmem>>, vector<2x8x256xf32>
      %cst_11 = arith.constant dense<0.000000e+00> : vector<2x8xf32>
      %10 = vector.multi_reduction <add>, %9, %cst_11 [2] : vector<2x8x256xf32> to vector<2x8xf32>
      %c0_12 = arith.constant 0 : index
      %c0_13 = arith.constant 0 : index
      %11 = vector.load %arg5[%c0_12, %c0_13] : memref<8x256xf32, #tpu.memory_space<vmem>>, vector<8x256xf32>
      %cst_14 = arith.constant dense<0.000000e+00> : vector<2x256xf32>
      %12 = tpu.matmul %10, %11, %cst_14 {dimension_numbers = #tpu.dot_dimension_numbers<[1], [0], [0], [1], [0, 0, 1, 1], [], []>} : vector<2x8xf32>, vector<8x256xf32>, vector<2x256xf32> -> vector<2x256xf32>
      %cst_15 = arith.constant dense<0.000000e+00> : vector<256xf32>
      %13 = vector.multi_reduction <add>, %12, %cst_15 [0] : vector<2x256xf32> to vector<256xf32>
      %14 = vector.shape_cast %13 : vector<256xf32> to vector<1x256xf32>
      %c1 = arith.constant 1 : index
      %15 = memref.load %arg1[%c1] : memref<2xf32, #tpu.memory_space<smem>>
      %16 = vector.broadcast %15 : f32 to vector<1x256xf32>
      %17 = arith.mulf %14, %16 : vector<1x256xf32>
      %c0_16 = arith.constant 0 : index
      %18 = memref.load %arg1[%c0_16] : memref<2xf32, #tpu.memory_space<smem>>
      %19 = vector.broadcast %18 : f32 to vector<1x256xf32>
      %20 = arith.subf %19, %17 : vector<1x256xf32>
      %21 = vector.shape_cast %20 : vector<1x256xf32> to vector<1x256xf32>
      %22 = vector.broadcast %21 : vector<1x256xf32> to vector<2x256xf32>
      %c0_17 = arith.constant 0 : index
      %c0_18 = arith.constant 0 : index
      %23 = vector.load %arg6[%c0_17, %c0_18] : memref<2x256xf32, #tpu.memory_space<vmem>>, vector<2x256xf32>
      tpu.vector_store %arg6[%c0_17, %c0_18], %22 {strides = array<i32>} : memref<2x256xf32, #tpu.memory_space<vmem>>, vector<2x256xf32>,
    } else {
    }
    %c0 = arith.constant 0 : index
    %c0_1 = arith.constant 0 : index
    %3 = vector.load %arg6[%c0, %c0_1] : memref<2x256xf32, #tpu.memory_space<vmem>>, vector<2x256xf32>
    %c0_2 = arith.constant 0 : index
    %c0_3 = arith.constant 0 : index
    %4 = vector.load %arg2[%c0_2, %c0_3] : memref<2x1024xf32, #tpu.memory_space<vmem>>, vector<2x1024xf32>
    %c0_4 = arith.constant 0 : index
    %c0_5 = arith.constant 0 : index
    %5 = vector.load %arg4[%c0_4, %c0_5] : memref<1024x256xf32, #tpu.memory_space<vmem>>, vector<1024x256xf32>
    %cst = arith.constant dense<0.000000e+00> : vector<2x256xf32>
    %6 = tpu.matmul %4, %5, %cst {dimension_numbers = #tpu.dot_dimension_numbers<[1], [0], [0], [1], [0, 0, 1, 1], [], []>} : vector<2x1024xf32>, vector<1024x256xf32>, vector<2x256xf32> -> vector<2x256xf32>
    %7 = arith.addf %3, %6 : vector<2x256xf32>
    %c0_6 = arith.constant 0 : index
    %c0_7 = arith.constant 0 : index
    %8 = vector.load %arg6[%c0_6, %c0_7] : memref<2x256xf32, #tpu.memory_space<vmem>>, vector<2x256xf32>
    tpu.vector_store %arg6[%c0_6, %c0_7], %7 {strides = array<i32>} : memref<2x256xf32, #tpu.memory_space<vmem>>, vector<2x256xf32>,
    return
  }
  func.func @transform_0(%arg0: i32) -> i32 {
    %c0_i32 = arith.constant 0 : i32
    %c0_i32_0 = arith.constant 0 : i32
    return %c0_i32 : i32
  }
  func.func @transform_1(%arg0: i32) -> (i32, i32) {
    %c0_i32 = arith.constant 0 : i32
    %c0_i32_0 = arith.constant 0 : i32
    return %c0_i32, %arg0 : i32, i32
  }
  func.func @transform_2(%arg0: i32) -> (i32, i32, i32) {
    %c0_i32 = arith.constant 0 : i32
    %c0_i32_0 = arith.constant 0 : i32
    %c0_i32_1 = arith.constant 0 : i32
    %c0_i32_2 = arith.constant 0 : i32
    return %c0_i32, %c0_i32_0, %c0_i32_1 : i32, i32, i32
  }
  func.func @transform_3(%arg0: i32) -> (i32, i32) {
    %c0_i32 = arith.constant 0 : i32
    %c0_i32_0 = arith.constant 0 : i32
    return %arg0, %c0_i32 : i32, i32
  }
  func.func @transform_4(%arg0: i32) -> (i32, i32) {
    %c0_i32 = arith.constant 0 : i32
    %c0_i32_0 = arith.constant 0 : i32
    %c0_i32_1 = arith.constant 0 : i32
    return %c0_i32, %c0_i32_0 : i32, i32
  }
  func.func @transform_5(%arg0: i32) -> (i32, i32) {
    %c0_i32 = arith.constant 0 : i32
    %c0_i32_0 = arith.constant 0 : i32
    %c0_i32_1 = arith.constant 0 : i32
    return %c0_i32, %c0_i32_0 : i32, i32
  }
}

</mosaic_0001>

<llo_original>
// kernel: tpu_custom_call.1
$region0: #{tpu_custom_call.1}
  #allocation0 [shape = 'u32[]', space=smem, size = 0x4, offset = 0x4, fixed_abs, tag = 'smem constant byte address 0x4 - core index']
  #allocation1 [shape = 'u32[144,128]{1,0:T(1,128)}', space=vmem, size = 0x12000, scoped, tag = 'internal scratch']
  %s0 = inlined_call_operand.hbm [shape: f32[2], index: 0, kind: input, shape index: {}]
  %s1 = inlined_call_operand.hbm [shape: f32[2,1024], index: 1, kind: input, shape index: {}]
  %s2 = inlined_call_operand.hbm [shape: f32[2,8,256], index: 2, kind: input, shape index: {}]
  %s3 = inlined_call_operand.hbm [shape: f32[1024,256], index: 3, kind: input, shape index: {}]
  %s4 = inlined_call_operand.hbm [shape: f32[8,256], index: 4, kind: input, shape index: {}]
  %s5 = inlined_call_operand.hbm [shape: f32[2,256], index: 5, kind: output, shape index: {}]
  %s6 = sld [smem:[#allocation0]]
  $region54: #{tpu_custom_call.1} parent=0
    _
  %s8 = ssub.s32 1, %s6
  %s9 = scalar_select 0, %s8, %s6
  $region1: #{tpu_custom_call.1} parent=0
    #allocation2 [shape = 'u8[512]{0}', space=smem, size = 0x200, scoped, tag = 'input window, operand 0, single buffered']
    #allocation3 [shape = 's32[1]{0}', space=sflag, size = 0x4, scoped, tag = 'scoped memory for tpu_custom_call.1']
    #allocation4 [shape = 's32[1]{0}', space=sflag, size = 0x4, scoped, tag = 'scoped memory for tpu_custom_call.1']
    #allocation5 [shape = 's32[1]{0}', space=sflag, size = 0x4, scoped, tag = 'scoped memory for tpu_custom_call.1']
    #allocation6 [shape = 'u8[8192]{0}', space=vmem, size = 0x2000, scoped, tag = 'input window, operand 1, single buffered']
    #allocation7 [shape = 'u8[16384]{0}', space=vmem, size = 0x4000, scoped, tag = 'input window, operand 2, single buffered']
    #allocation8 [shape = 's32[1]{0}', space=sflag, size = 0x4, scoped, tag = 'scoped memory for tpu_custom_call.1']
    #allocation9 [shape = 'u8[1048576]{0}', space=vmem, size = 0x100000, scoped, tag = 'input window, operand 3, single buffered']
    #allocation10 [shape = 'u8[8192]{0}', space=vmem, size = 0x2000, scoped, tag = 'input window, operand 4, single buffered']
    #allocation11 [shape = 's32[1]{0}', space=sflag, size = 0x4, scoped, tag = 'scoped memory for tpu_custom_call.1']
    #allocation12 [shape = 'u8[2048]{0}', space=vmem, size = 0x800, scoped, tag = 'output window, operand 0, single buffered']
    %10 = vsyncpa [#allocation5], 0
    %11 = vsyncpa [#allocation3], 0
    %12 = vsyncpa [#allocation8], 0
    %13 = vsyncpa [#allocation11], 0
    %14 = vsyncpa [#allocation4], 0
    // Predicated region
    $region2: #{tpu_custom_call.1} parent=1 // pred_check
      _
    $region3: #{tpu_custom_call.1} parent=1 // pred_check_branch
      %16 = sbr.rel (0) target = $region5
    $region4: #{tpu_custom_call.1} parent=1 // pred_region
      %s18 = ssub.s32 16, 16
      %19 = vsyncadd [#allocation5], %s18
      %22 = dma.hbm_to_smem %s0, 16, [#allocation2], [#allocation5]
    $region5: #{tpu_custom_call.1} parent=1 // pred_fallthru
      _
    // Predicated region
    $region6: #{tpu_custom_call.1} parent=1 // pred_check
      _
    $region7: #{tpu_custom_call.1} parent=1 // pred_check_branch
      %24 = sbr.rel (0) target = $region9
    $region8: #{tpu_custom_call.1} parent=1 // pred_region
      %s26 = ssub.s32 256, 256
      %27 = vsyncadd [#allocation3], %s26
      %s29 = sshll.u32 [#allocation6], 4
      %s30 = int_to_ptr.vmem [resolvable:$true] %s29
      %32 = dma.hbm_to_vmem [thread:$0]  %s1, 256, %s30, [#allocation3]
    $region9: #{tpu_custom_call.1} parent=1 // pred_fallthru
      _
    // Predicated region
    $region10: #{tpu_custom_call.1} parent=1 // pred_check
      _
    $region11: #{tpu_custom_call.1} parent=1 // pred_check_branch
      %34 = sbr.rel (0) target = $region13
    $region12: #{tpu_custom_call.1} parent=1 // pred_region
      %s36 = ssub.s32 512, 512
      %37 = vsyncadd [#allocation8], %s36
      %s38 = sshll.u32 [#allocation7], 4
      %s39 = int_to_ptr.vmem [resolvable:$true] %s38
      %44 = dma.hbm_to_vmem [thread:$0]  %s2, 512, %s39, [#allocation8], 256, 256, 16
    $region13: #{tpu_custom_call.1} parent=1 // pred_fallthru
      _
    // Predicated region
    $region14: #{tpu_custom_call.1} parent=1 // pred_check
      _
    $region15: #{tpu_custom_call.1} parent=1 // pred_check_branch
      %46 = sbr.rel (0) target = $region17
    $region16: #{tpu_custom_call.1} parent=1 // pred_region
      %s48 = ssub.s32 32768, 32768
      %49 = vsyncadd [#allocation8], %s48
      %s50 = sshll.u32 [#allocation9], 4
      %s51 = int_to_ptr.vmem [resolvable:$true] %s50
      %56 = dma.hbm_to_vmem [thread:$0]  %s3, 32768, %s51, [#allocation8], 256, 256, 16
    $region17: #{tpu_custom_call.1} parent=1 // pred_fallthru
      _
    // Predicated region
    $region18: #{tpu_custom_call.1} parent=1 // pred_check
      _
    $region19: #{tpu_custom_call.1} parent=1 // pred_check_branch
      %58 = sbr.rel (0) target = $region21
    $region20: #{tpu_custom_call.1} parent=1 // pred_region
      %s60 = ssub.s32 256, 256
      %61 = vsyncadd [#allocation11], %s60
      %s63 = sshll.u32 [#allocation10], 4
      %s64 = int_to_ptr.vmem [resolvable:$true] %s63
      %66 = dma.hbm_to_vmem [thread:$0]  %s4, 256, %s64, [#allocation11]
    $region21: #{tpu_custom_call.1} parent=1 // pred_fallthru
      _
    // Predicated region
    $region22: #{tpu_custom_call.1} parent=1 // pred_check
      _
    $region23: #{tpu_custom_call.1} parent=1 // pred_check_branch
      %68 = sbr.rel (0) target = $region25
    $region24: #{tpu_custom_call.1} parent=1 // pred_region
      %69 = dma.done [#allocation5], 16
    $region25: #{tpu_custom_call.1} parent=1 // pred_fallthru
      _
    // Predicated region
    $region26: #{tpu_custom_call.1} parent=1 // pred_check
      _
    $region27: #{tpu_custom_call.1} parent=1 // pred_check_branch
      %71 = sbr.rel (0) target = $region29
    $region28: #{tpu_custom_call.1} parent=1 // pred_region
      %72 = dma.done [#allocation3], 256
    $region29: #{tpu_custom_call.1} parent=1 // pred_fallthru
      _
    // Predicated region
    $region30: #{tpu_custom_call.1} parent=1 // pred_check
      _
    $region31: #{tpu_custom_call.1} parent=1 // pred_check_branch
      %74 = sbr.rel (0) target = $region33
    $region32: #{tpu_custom_call.1} parent=1 // pred_region
      %75 = dma.done [#allocation8], 512
    $region33: #{tpu_custom_call.1} parent=1 // pred_fallthru
      _
    // Predicated region
    $region34: #{tpu_custom_call.1} parent=1 // pred_check
      _
    $region35: #{tpu_custom_call.1} parent=1 // pred_check_branch
      %77 = sbr.rel (0) target = $region37
    $region36: #{tpu_custom_call.1} parent=1 // pred_region
      %78 = dma.done [#allocation8], 32768
    $region37: #{tpu_custom_call.1} parent=1 // pred_fallthru
      _
    // Predicated region
    $region38: #{tpu_custom_call.1} parent=1 // pred_check
      _
    $region39: #{tpu_custom_call.1} parent=1 // pred_check_branch
      %80 = sbr.rel (0) target = $region41
    $region40: #{tpu_custom_call.1} parent=1 // pred_region
      %81 = dma.done [#allocation11], 256
    $region41: #{tpu_custom_call.1} parent=1 // pred_fallthru
      _
    %82 = sfence
    %p83 = scmp.eq.s32.totalorder 0, 0
    // Predicated region
    $region42: #{tpu_custom_call.1} parent=1 // pred_check
      %p84 = pneg %p83
    $region43: #{tpu_custom_call.1} parent=1 // pred_check_branch
      %86 = sbr.rel (%p84) target = $region45
    $region44: #{tpu_custom_call.1} parent=1 // pred_region
      %v87 = vld [vmem:[#allocation7] sm:$0xff]
      %v88 = vld [vmem:[#allocation7 + $0x8] sm:$0xff]
      %v89 = vld [vmem:[#allocation7 + $0x10] sm:$0xff]
      %v90 = vld [vmem:[#allocation7 + $0x18] sm:$0xff]
      %v91 = vadd.f32 %v87, %v88
      %92 = vadd.xlane.f32.xlu0 %v91
      %v93 = vpop.xlane.xlu0 %92
      %v94 = vadd.f32 %v89, %v90
      %95 = vadd.xlane.f32.xlu0 %v94
      %v96 = vpop.xlane.xlu0 %95
      %v97 = vld [vmem:[#allocation10] sm:$0xff]
      %v98 = vld [vmem:[#allocation10 + $0x8] sm:$0xff]
      %v101 = vlaneseq
      %v102 = vand.u32 %v101, 127
      %v103 = vlaneseq
      %v104 = vshrl.u32 %v103, 7
      %v105 = vsub.s32 %v102, %v104
      %v106 = vrot.slane %v93, %v105
      %v107 = vlaneseq
      %v108 = vshrl.u32 %v107, 7
      %v109 = vsub.s32 %v102, %v108
      %v110 = vrot.slane %v96, %v109
      %vm111 = vcmask 1041409
      %v112 = vsel %vm111, %v110, %v106
      %vm113 = vcmask 64512
      %v114 = vsel %vm113, %v112, 0
      %116 = vmatprep.subr.mxu0 %v98
      %117 = vmatpush1.msra.mxu0 %v97
      %118 = vmatprep.subr.mxu0 0.0
      %119 = vmatpush1.msra.mxu0 0.0
      %120 = vmatprep.subr.mxu0 0.0
      %121 = vmatpush1.msra.mxu0 0.0
      %122 = vmatprep.subr.mxu0 0.0
      %123 = vmatpush1.msra.mxu0 0.0
      %124 = vmatprep.subr.mxu0 0.0
      %125 = vmatpush1.msra.mxu0 0.0
      %126 = vmatprep.subr.mxu0 0.0
      %127 = vmatpush1.msra.mxu0 0.0
      %128 = vmatprep.subr.mxu0 0.0
      %129 = vmatpush1.msra.mxu0 0.0
      %130 = vmatprep.subr.mxu0 0.0
      %131 = vmatpush1.msra.mxu0 0.0
      %132 = vmatprep.subr.mxu0 0.0
      %133 = vmatpush1.msra.mxu0 0.0
      %134 = vmatprep.subr.mxu0 0.0
      %135 = vmatpush1.msra.mxu0 0.0
      %136 = vmatprep.subr.mxu0 0.0
      %137 = vmatpush1.msra.mxu0 0.0
      %138 = vmatprep.subr.mxu0 0.0
      %139 = vmatpush1.msra.mxu0 0.0
      %140 = vmatprep.subr.mxu0 0.0
      %141 = vmatpush1.msra.mxu0 0.0
      %142 = vmatprep.subr.mxu0 0.0
      %143 = vmatpush1.msra.mxu0 0.0
      %144 = vmatprep.subr.mxu0 0.0
      %145 = vmatpush1.msra.mxu0 0.0
      %146 = vmatprep.subr.mxu0 0.0
      %147 = vmatpush1.msra.mxu0 0.0
      %148 = vmatprep.subr.mxu0 0.0
      %149 = vmatpush1.msra.mxu0 0.0
      %150 = vmatprep.subr.mxu0 0.0
      %151 = vmatpush1.msra.mxu0 0.0
      %152 = vmatprep.subr.mxu0 0.0
      %153 = vmatpush1.msra.mxu0 0.0
      %154 = vmatprep.subr.mxu0 0.0
      %155 = vmatpush1.msra.mxu0 0.0
      %156 = vmatprep.subr.mxu0 0.0
      %157 = vmatpush1.msra.mxu0 0.0
      %158 = vmatprep.subr.mxu0 0.0
      %159 = vmatpush1.msra.mxu0 0.0
      %160 = vmatprep.subr.mxu0 0.0
      %161 = vmatpush1.msra.mxu0 0.0
      %162 = vmatprep.subr.mxu0 0.0
      %163 = vmatpush1.msra.mxu0 0.0
      %164 = vmatprep.subr.mxu0 0.0
      %165 = vmatpush1.msra.mxu0 0.0
      %166 = vmatprep.subr.mxu0 0.0
      %167 = vmatpush1.msra.mxu0 0.0
      %168 = vmatprep.subr.mxu0 0.0
      %169 = vmatpush1.msra.mxu0 0.0
      %170 = vmatprep.subr.mxu0 0.0
      %171 = vmatpush1.msra.mxu0 0.0
      %172 = vmatprep.subr.mxu0 0.0
      %173 = vmatpush1.msra.mxu0 0.0
      %174 = vmatprep.subr.mxu0 0.0
      %175 = vmatpush1.msra.mxu0 0.0
      %176 = vmatprep.subr.mxu0 0.0
      %177 = vmatpush1.msra.mxu0 0.0
      %178 = vmatprep.subr.mxu0 0.0
      %179 = vmatpush1.msra.mxu0 0.0
      %180 = vmatprep.mubr.f32.mxu0 0.0
      %181 = vmatmul.mubr.f32.gmra.mrb[0].mxu0 %v114
      %v182 = vpop.f32.mrb[0].mxu0
      %v183 = vadd.f32 0.0, %v182
      %v184 = vpop.f32.mrb[0].mxu0
      %v185 = vadd.f32 0.0, %v184
      %186 = vdwg.mxu0
      %vm187 = vcmask 1041408
      %v188 = vsel %vm187, %v183, 0.0
      %v189 = vrot.slane %v188, 4
      %v190 = vadd.f32 %v188, %v189
      %v191 = vrot.slane %v190, 2
      %v192 = vadd.f32 %v190, %v191
      %v193 = vrot.slane %v192, 1
      %v194 = vadd.f32 %v192, %v193
      %v195 = vsel %vm187, %v185, 0.0
      %v196 = vrot.slane %v195, 4
      %v197 = vadd.f32 %v195, %v196
      %v198 = vrot.slane %v197, 2
      %v199 = vadd.f32 %v197, %v198
      %v200 = vrot.slane %v199, 1
      %v201 = vadd.f32 %v199, %v200
      %s202 = sld [smem:[#allocation2 + $0x1]]
      %v203 = vstv %s202
      %v204 = vmul.f32 %v194, %v203
      %v205 = vmul.f32 %v201, %v203
      %s206 = sld [smem:[#allocation2]]
      %v207 = vstv %s206
      %v208 = vsub.f32 %v207, %v204
      %v209 = vsub.f32 %v207, %v205
      %v212 = vcombine.low %v208, %v209
      %v214 = vunpack.c.l.s4 1983009808
      %v215 = vunpack.c.0.s8 %v214
      %v216 = vlaneseq
      %v217 = vshrl.u32 %v216, 7
      %v218 = vsub.s32 %v215, %v217
      %v219 = vrot.slane %v212, %v218
      %221 = vst [vmem:[#allocation12] sm:$0xf] %v219
    $region45: #{tpu_custom_call.1} parent=1 // pred_fallthru
      _
    %v222 = vld [vmem:[#allocation12] sm:$0xf]
    %v223 = vld [vmem:[#allocation6] sm:$0xff]
    %v224 = vld [vmem:[#allocation6 + $0x8] sm:$0xff]
    %v225 = vld [vmem:[#allocation9] sm:$0xff]
    %v226 = vld [vmem:[#allocation9 + $0x8] sm:$0xff]
    %v227 = vld [vmem:[#allocation9 + $0x10] sm:$0xff]
    %v228 = vld [vmem:[#allocation9 + $0x18] sm:$0xff]
    %v229 = vld [vmem:[#allocation9 + $0x20] sm:$0xff]
    %v230 = vld [vmem:[#allocation9 + $0x28] sm:$0xff]
    %v231 = vld [vmem:[#allocation9 + $0x30] sm:$0xff]
    %v232 = vld [vmem:[#allocation9 + $0x38] sm:$0xff]
    %v233 = vld [vmem:[#allocation9 + $0x40] sm:$0xff]
    %v234 = vld [vmem:[#allocation9 + $0x48] sm:$0xff]
    %v235 = vld [vmem:[#allocation9 + $0x50] sm:$0xff]
    %v236 = vld [vmem:[#allocation9 + $0x58] sm:$0xff]
    %v237 = vld [vmem:[#allocation9 + $0x60] sm:$0xff]
    %v238 = vld [vmem:[#allocation9 + $0x68] sm:$0xff]
    %v239 = vld [vmem:[#allocation9 + $0x70] sm:$0xff]
    %v240 = vld [vmem:[#allocation9 + $0x78] sm:$0xff]
    %v241 = vld [vmem:[#allocation9 + $0x80] sm:$0xff]
    %v242 = vld [vmem:[#allocation9 + $0x88] sm:$0xff]
    %v243 = vld [vmem:[#allocation9 + $0x90] sm:$0xff]
    %v244 = vld [vmem:[#allocation9 + $0x98] sm:$0xff]
    %v245 = vld [vmem:[#allocation9 + $0xa0] sm:$0xff]
    %v246 = vld [vmem:[#allocation9 + $0xa8] sm:$0xff]
    %v247 = vld [vmem:[#allocation9 + $0xb0] sm:$0xff]
    %v248 = vld [vmem:[#allocation9 + $0xb8] sm:$0xff]
    %v249 = vld [vmem:[#allocation9 + $0xc0] sm:$0xff]
    %v250 = vld [vmem:[#allocation9 + $0xc8] sm:$0xff]
    %v251 = vld [vmem:[#allocation9 + $0xd0] sm:$0xff]
    %v252 = vld [vmem:[#allocation9 + $0xd8] sm:$0xff]
    %v253 = vld [vmem:[#allocation9 + $0xe0] sm:$0xff]
    %v254 = vld [vmem:[#allocation9 + $0xe8] sm:$0xff]
    %v255 = vld [vmem:[#allocation9 + $0xf0] sm:$0xff]
    %v256 = vld [vmem:[#allocation9 + $0xf8] sm:$0xff]
    %v257 = vld [vmem:[#allocation9 + $0x100] sm:$0xff]
    %v258 = vld [vmem:[#allocation9 + $0x108] sm:$0xff]
    %v259 = vld [vmem:[#allocation9 + $0x110] sm:$0xff]
    %v260 = vld [vmem:[#allocation9 + $0x118] sm:$0xff]
    %v261 = vld [vmem:[#allocation9 + $0x120] sm:$0xff]
    %v262 = vld [vmem:[#allocation9 + $0x128] sm:$0xff]
    %v263 = vld [vmem:[#allocation9 + $0x130] sm:$0xff]
    %v264 = vld [vmem:[#allocation9 + $0x138] sm:$0xff]
    %v265 = vld [vmem:[#allocation9 + $0x140] sm:$0xff]
    %v266 = vld [vmem:[#allocation9 + $0x148] sm:$0xff]
    %v267 = vld [vmem:[#allocation9 + $0x150] sm:$0xff]
    %v268 = vld [vmem:[#allocation9 + $0x158] sm:$0xff]
    %v269 = vld [vmem:[#allocation9 + $0x160] sm:$0xff]
    %v270 = vld [vmem:[#allocation9 + $0x168] sm:$0xff]
    %v271 = vld [vmem:[#allocation9 + $0x170] sm:$0xff]
    %v272 = vld [vmem:[#allocation9 + $0x178] sm:$0xff]
    %v273 = vld [vmem:[#allocation9 + $0x180] sm:$0xff]
    %v274 = vld [vmem:[#allocation9 + $0x188] sm:$0xff]
    %v275 = vld [vmem:[#allocation9 + $0x190] sm:$0xff]
    %v276 = vld [vmem:[#allocation9 + $0x198] sm:$0xff]
    %v277 = vld [vmem:[#allocation9 + $0x1a0] sm:$0xff]
    %v278 = vld [vmem:[#allocation9 + $0x1a8] sm:$0xff]
    %v279 = vld [vmem:[#allocation9 + $0x1b0] sm:$0xff]
    %v280 = vld [vmem:[#allocation9 + $0x1b8] sm:$0xff]
    %v281 = vld [vmem:[#allocation9 + $0x1c0] sm:$0xff]
    %v282 = vld [vmem:[#allocation9 + $0x1c8] sm:$0xff]
    %v283 = vld [vmem:[#allocation9 + $0x1d0] sm:$0xff]
    %v284 = vld [vmem:[#allocation9 + $0x1d8] sm:$0xff]
    %v285 = vld [vmem:[#allocation9 + $0x1e0] sm:$0xff]
    %v286 = vld [vmem:[#allocation9 + $0x1e8] sm:$0xff]
    %v287 = vld [vmem:[#allocation9 + $0x1f0] sm:$0xff]
    %v288 = vld [vmem:[#allocation9 + $0x1f8] sm:$0xff]
    %v289 = vld [vmem:[#allocation9 + $0x200] sm:$0xff]
    %v290 = vld [vmem:[#allocation9 + $0x208] sm:$0xff]
    %v291 = vld [vmem:[#allocation9 + $0x210] sm:$0xff]
    %v292 = vld [vmem:[#allocation9 + $0x218] sm:$0xff]
    %v293 = vld [vmem:[#allocation9 + $0x220] sm:$0xff]
    %v294 = vld [vmem:[#allocation9 + $0x228] sm:$0xff]
    %v295 = vld [vmem:[#allocation9 + $0x230] sm:$0xff]
    %v296 = vld [vmem:[#allocation9 + $0x238] sm:$0xff]
    %v297 = vld [vmem:[#allocation9 + $0x240] sm:$0xff]
    %v298 = vld [vmem:[#allocation9 + $0x248] sm:$0xff]
    %v299 = vld [vmem:[#allocation9 + $0x250] sm:$0xff]
    %v300 = vld [vmem:[#allocation9 + $0x258] sm:$0xff]
    %v301 = vld [vmem:[#allocation9 + $0x260] sm:$0xff]
    %v302 = vld [vmem:[#allocation9 + $0x268] sm:$0xff]
    %v303 = vld [vmem:[#allocation9 + $0x270] sm:$0xff]
    %v304 = vld [vmem:[#allocation9 + $0x278] sm:$0xff]
    %v305 = vld [vmem:[#allocation9 + $0x280] sm:$0xff]
    %v306 = vld [vmem:[#allocation9 + $0x288] sm:$0xff]
    %v307 = vld [vmem:[#allocation9 + $0x290] sm:$0xff]
    %v308 = vld [vmem:[#allocation9 + $0x298] sm:$0xff]
    %v309 = vld [vmem:[#allocation9 + $0x2a0] sm:$0xff]
    %v310 = vld [vmem:[#allocation9 + $0x2a8] sm:$0xff]
    %v311 = vld [vmem:[#allocation9 + $0x2b0] sm:$0xff]
    %v312 = vld [vmem:[#allocation9 + $0x2b8] sm:$0xff]
    %v313 = vld [vmem:[#allocation9 + $0x2c0] sm:$0xff]
    %v314 = vld [vmem:[#allocation9 + $0x2c8] sm:$0xff]
    %v315 = vld [vmem:[#allocation9 + $0x2d0] sm:$0xff]
    %v316 = vld [vmem:[#allocation9 + $0x2d8] sm:$0xff]
    %v317 = vld [vmem:[#allocation9 + $0x2e0] sm:$0xff]
    %v318 = vld [vmem:[#allocation9 + $0x2e8] sm:$0xff]
    %v319 = vld [vmem:[#allocation9 + $0x2f0] sm:$0xff]
    %v320 = vld [vmem:[#allocation9 + $0x2f8] sm:$0xff]
    %v321 = vld [vmem:[#allocation9 + $0x300] sm:$0xff]
    %v322 = vld [vmem:[#allocation9 + $0x308] sm:$0xff]
    %v323 = vld [vmem:[#allocation9 + $0x310] sm:$0xff]
    %v324 = vld [vmem:[#allocation9 + $0x318] sm:$0xff]
    %v325 = vld [vmem:[#allocation9 + $0x320] sm:$0xff]
    %v326 = vld [vmem:[#allocation9 + $0x328] sm:$0xff]
    %v327 = vld [vmem:[#allocation9 + $0x330] sm:$0xff]
    %v328 = vld [vmem:[#allocation9 + $0x338] sm:$0xff]
    %v329 = vld [vmem:[#allocation9 + $0x340] sm:$0xff]
    %v330 = vld [vmem:[#allocation9 + $0x348] sm:$0xff]
    %v331 = vld [vmem:[#allocation9 + $0x350] sm:$0xff]
    %v332 = vld [vmem:[#allocation9 + $0x358] sm:$0xff]
    %v333 = vld [vmem:[#allocation9 + $0x360] sm:$0xff]
    %v334 = vld [vmem:[#allocation9 + $0x368] sm:$0xff]
    %v335 = vld [vmem:[#allocation9 + $0x370] sm:$0xff]
    %v336 = vld [vmem:[#allocation9 + $0x378] sm:$0xff]
    %v337 = vld [vmem:[#allocation9 + $0x380] sm:$0xff]
    %v338 = vld [vmem:[#allocation9 + $0x388] sm:$0xff]
    %v339 = vld [vmem:[#allocation9 + $0x390] sm:$0xff]
    %v340 = vld [vmem:[#allocation9 + $0x398] sm:$0xff]
    %v341 = vld [vmem:[#allocation9 + $0x3a0] sm:$0xff]
    %v342 = vld [vmem:[#allocation9 + $0x3a8] sm:$0xff]
    %v343 = vld [vmem:[#allocation9 + $0x3b0] sm:$0xff]
    %v344 = vld [vmem:[#allocation9 + $0x3b8] sm:$0xff]
    %v345 = vld [vmem:[#allocation9 + $0x3c0] sm:$0xff]
    %v346 = vld [vmem:[#allocation9 + $0x3c8] sm:$0xff]
    %v347 = vld [vmem:[#allocation9 + $0x3d0] sm:$0xff]
    %v348 = vld [vmem:[#allocation9 + $0x3d8] sm:$0xff]
    %v349 = vld [vmem:[#allocation9 + $0x3e0] sm:$0xff]
    %v350 = vld [vmem:[#allocation9 + $0x3e8] sm:$0xff]
    %v351 = vld [vmem:[#allocation9 + $0x3f0] sm:$0xff]
    %v352 = vld [vmem:[#allocation9 + $0x3f8] sm:$0xff]
    %v353 = vld [vmem:[#allocation9 + $0x400] sm:$0xff]
    %v354 = vld [vmem:[#allocation9 + $0x408] sm:$0xff]
    %v355 = vld [vmem:[#allocation9 + $0x410] sm:$0xff]
    %v356 = vld [vmem:[#allocation9 + $0x418] sm:$0xff]
    %v357 = vld [vmem:[#allocation9 + $0x420] sm:$0xff]
    %v358 = vld [vmem:[#allocation9 + $0x428] sm:$0xff]
    %v359 = vld [vmem:[#allocation9 + $0x430] sm:$0xff]
    %v360 = vld [vmem:[#allocation9 + $0x438] sm:$0xff]
    %v361 = vld [vmem:[#allocation9 + $0x440] sm:$0xff]
    %v362 = vld [vmem:[#allocation9 + $0x448] sm:$0xff]
    %v363 = vld [vmem:[#allocation9 + $0x450] sm:$0xff]
    %v364 = vld [vmem:[#allocation9 + $0x458] sm:$0xff]
    %v365 = vld [vmem:[#allocation9 + $0x460] sm:$0xff]
    %v366 = vld [vmem:[#allocation9 + $0x468] sm:$0xff]
    %v367 = vld [vmem:[#allocation9 + $0x470] sm:$0xff]
    %v368 = vld [vmem:[#allocation9 + $0x478] sm:$0xff]
    %v369 = vld [vmem:[#allocation9 + $0x480] sm:$0xff]
    %v370 = vld [vmem:[#allocation9 + $0x488] sm:$0xff]
    %v371 = vld [vmem:[#allocation9 + $0x490] sm:$0xff]
    %v372 = vld [vmem:[#allocation9 + $0x498] sm:$0xff]
    %v373 = vld [vmem:[#allocation9 + $0x4a0] sm:$0xff]
    %v374 = vld [vmem:[#allocation9 + $0x4a8] sm:$0xff]
    %v375 = vld [vmem:[#allocation9 + $0x4b0] sm:$0xff]
    %v376 = vld [vmem:[#allocation9 + $0x4b8] sm:$0xff]
    %v377 = vld [vmem:[#allocation9 + $0x4c0] sm:$0xff]
    %v378 = vld [vmem:[#allocation9 + $0x4c8] sm:$0xff]
    %v379 = vld [vmem:[#allocation9 + $0x4d0] sm:$0xff]
    %v380 = vld [vmem:[#allocation9 + $0x4d8] sm:$0xff]
    %v381 = vld [vmem:[#allocation9 + $0x4e0] sm:$0xff]
    %v382 = vld [vmem:[#allocation9 + $0x4e8] sm:$0xff]
    %v383 = vld [vmem:[#allocation9 + $0x4f0] sm:$0xff]
    %v384 = vld [vmem:[#allocation9 + $0x4f8] sm:$0xff]
    %v385 = vld [vmem:[#allocation9 + $0x500] sm:$0xff]
    %v386 = vld [vmem:[#allocation9 + $0x508] sm:$0xff]
    %v387 = vld [vmem:[#allocation9 + $0x510] sm:$0xff]
    %v388 = vld [vmem:[#allocation9 + $0x518] sm:$0xff]
    %v389 = vld [vmem:[#allocation9 + $0x520] sm:$0xff]
    %v390 = vld [vmem:[#allocation9 + $0x528] sm:$0xff]
    %v391 = vld [vmem:[#allocation9 + $0x530] sm:$0xff]
    %v392 = vld [vmem:[#allocation9 + $0x538] sm:$0xff]
    %v393 = vld [vmem:[#allocation9 + $0x540] sm:$0xff]
    %v394 = vld [vmem:[#allocation9 + $0x548] sm:$0xff]
    %v395 = vld [vmem:[#allocation9 + $0x550] sm:$0xff]
    %v396 = vld [vmem:[#allocation9 + $0x558] sm:$0xff]
    %v397 = vld [vmem:[#allocation9 + $0x560] sm:$0xff]
    %v398 = vld [vmem:[#allocation9 + $0x568] sm:$0xff]
    %v399 = vld [vmem:[#allocation9 + $0x570] sm:$0xff]
    %v400 = vld [vmem:[#allocation9 + $0x578] sm:$0xff]
    %v401 = vld [vmem:[#allocation9 + $0x580] sm:$0xff]
    %v402 = vld [vmem:[#allocation9 + $0x588] sm:$0xff]
    %v403 = vld [vmem:[#allocation9 + $0x590] sm:$0xff]
    %v404 = vld [vmem:[#allocation9 + $0x598] sm:$0xff]
    %v405 = vld [vmem:[#allocation9 + $0x5a0] sm:$0xff]
    %v406 = vld [vmem:[#allocation9 + $0x5a8] sm:$0xff]
    %v407 = vld [vmem:[#allocation9 + $0x5b0] sm:$0xff]
    %v408 = vld [vmem:[#allocation9 + $0x5b8] sm:$0xff]
    %v409 = vld [vmem:[#allocation9 + $0x5c0] sm:$0xff]
    %v410 = vld [vmem:[#allocation9 + $0x5c8] sm:$0xff]
    %v411 = vld [vmem:[#allocation9 + $0x5d0] sm:$0xff]
    %v412 = vld [vmem:[#allocation9 + $0x5d8] sm:$0xff]
    %v413 = vld [vmem:[#allocation9 + $0x5e0] sm:$0xff]
    %v414 = vld [vmem:[#allocation9 + $0x5e8] sm:$0xff]
    %v415 = vld [vmem:[#allocation9 + $0x5f0] sm:$0xff]
    %v416 = vld [vmem:[#allocation9 + $0x5f8] sm:$0xff]
    %v417 = vld [vmem:[#allocation9 + $0x600] sm:$0xff]
    %v418 = vld [vmem:[#allocation9 + $0x608] sm:$0xff]
    %v419 = vld [vmem:[#allocation9 + $0x610] sm:$0xff]
    %v420 = vld [vmem:[#allocation9 + $0x618] sm:$0xff]
    %v421 = vld [vmem:[#allocation9 + $0x620] sm:$0xff]
    %v422 = vld [vmem:[#allocation9 + $0x628] sm:$0xff]
    %v423 = vld [vmem:[#allocation9 + $0x630] sm:$0xff]
    %v424 = vld [vmem:[#allocation9 + $0x638] sm:$0xff]
    %v425 = vld [vmem:[#allocation9 + $0x640] sm:$0xff]
    %v426 = vld [vmem:[#allocation9 + $0x648] sm:$0xff]
    %v427 = vld [vmem:[#allocation9 + $0x650] sm:$0xff]
    %v428 = vld [vmem:[#allocation9 + $0x658] sm:$0xff]
    %v429 = vld [vmem:[#allocation9 + $0x660] sm:$0xff]
    %v430 = vld [vmem:[#allocation9 + $0x668] sm:$0xff]
    %v431 = vld [vmem:[#allocation9 + $0x670] sm:$0xff]
    %v432 = vld [vmem:[#allocation9 + $0x678] sm:$0xff]
    %v433 = vld [vmem:[#allocation9 + $0x680] sm:$0xff]
    %v434 = vld [vmem:[#allocation9 + $0x688] sm:$0xff]
    %v435 = vld [vmem:[#allocation9 + $0x690] sm:$0xff]
    %v436 = vld [vmem:[#allocation9 + $0x698] sm:$0xff]
    %v437 = vld [vmem:[#allocation9 + $0x6a0] sm:$0xff]
    %v438 = vld [vmem:[#allocation9 + $0x6a8] sm:$0xff]
    %v439 = vld [vmem:[#allocation9 + $0x6b0] sm:$0xff]
    %v440 = vld [vmem:[#allocation9 + $0x6b8] sm:$0xff]
    %v441 = vld [vmem:[#allocation9 + $0x6c0] sm:$0xff]
    %v442 = vld [vmem:[#allocation9 + $0x6c8] sm:$0xff]
    %v443 = vld [vmem:[#allocation9 + $0x6d0] sm:$0xff]
    %v444 = vld [vmem:[#allocation9 + $0x6d8] sm:$0xff]
    %v445 = vld [vmem:[#allocation9 + $0x6e0] sm:$0xff]
    %v446 = vld [vmem:[#allocation9 + $0x6e8] sm:$0xff]
    %v447 = vld [vmem:[#allocation9 + $0x6f0] sm:$0xff]
    %v448 = vld [vmem:[#allocation9 + $0x6f8] sm:$0xff]
    %v449 = vld [vmem:[#allocation9 + $0x700] sm:$0xff]
    %v450 = vld [vmem:[#allocation9 + $0x708] sm:$0xff]
    %v451 = vld [vmem:[#allocation9 + $0x710] sm:$0xff]
    %v452 = vld [vmem:[#allocation9 + $0x718] sm:$0xff]
    %v453 = vld [vmem:[#allocation9 + $0x720] sm:$0xff]
    %v454 = vld [vmem:[#allocation9 + $0x728] sm:$0xff]
    %v455 = vld [vmem:[#allocation9 + $0x730] sm:$0xff]
    %v456 = vld [vmem:[#allocation9 + $0x738] sm:$0xff]
    %v457 = vld [vmem:[#allocation9 + $0x740] sm:$0xff]
    %v458 = vld [vmem:[#allocation9 + $0x748] sm:$0xff]
    %v459 = vld [vmem:[#allocation9 + $0x750] sm:$0xff]
    %v460 = vld [vmem:[#allocation9 + $0x758] sm:$0xff]
    %v461 = vld [vmem:[#allocation9 + $0x760] sm:$0xff]
    %v462 = vld [vmem:[#allocation9 + $0x768] sm:$0xff]
    %v463 = vld [vmem:[#allocation9 + $0x770] sm:$0xff]
    %v464 = vld [vmem:[#allocation9 + $0x778] sm:$0xff]
    %v465 = vld [vmem:[#allocation9 + $0x780] sm:$0xff]
    %v466 = vld [vmem:[#allocation9 + $0x788] sm:$0xff]
    %v467 = vld [vmem:[#allocation9 + $0x790] sm:$0xff]
    %v468 = vld [vmem:[#allocation9 + $0x798] sm:$0xff]
    %v469 = vld [vmem:[#allocation9 + $0x7a0] sm:$0xff]
    %v470 = vld [vmem:[#allocation9 + $0x7a8] sm:$0xff]
    %v471 = vld [vmem:[#allocation9 + $0x7b0] sm:$0xff]
    %v472 = vld [vmem:[#allocation9 + $0x7b8] sm:$0xff]
    %v473 = vld [vmem:[#allocation9 + $0x7c0] sm:$0xff]
    %v474 = vld [vmem:[#allocation9 + $0x7c8] sm:$0xff]
    %v475 = vld [vmem:[#allocation9 + $0x7d0] sm:$0xff]
    %v476 = vld [vmem:[#allocation9 + $0x7d8] sm:$0xff]
    %v477 = vld [vmem:[#allocation9 + $0x7e0] sm:$0xff]
    %v478 = vld [vmem:[#allocation9 + $0x7e8] sm:$0xff]
    %v479 = vld [vmem:[#allocation9 + $0x7f0] sm:$0xff]
    %v480 = vld [vmem:[#allocation9 + $0x7f8] sm:$0xff]
    %v483 = vcombine.high %v223, %v223
    %v485 = vunpack.c.l.s4 1983009808
    %v486 = vunpack.c.0.s8 %v485
    %v487 = vlaneseq
    %v488 = vshrl.u32 %v487, 7
    %v489 = vsub.s32 %v486, %v488
    %v490 = vrot.slane %v223, %v489
    %v492 = vunpack.c.l.s4 1983009808
    %v493 = vunpack.c.0.s8 %v492
    %v494 = vlaneseq
    %v495 = vshrl.u32 %v494, 7
    %v496 = vsub.s32 %v493, %v495
    %v497 = vrot.slane %v483, %v496
    %v498 = vcombine.high %v490, %v490
    %v499 = vcombine.high %v497, %v497
    %v500 = vcombine.high %v224, %v224
    %v502 = vunpack.c.l.s4 1983009808
    %v503 = vunpack.c.0.s8 %v502
    %v504 = vlaneseq
    %v505 = vshrl.u32 %v504, 7
    %v506 = vsub.s32 %v503, %v505
    %v507 = vrot.slane %v224, %v506
    %v509 = vunpack.c.l.s4 1983009808
    %v510 = vunpack.c.0.s8 %v509
    %v511 = vlaneseq
    %v512 = vshrl.u32 %v511, 7
    %v513 = vsub.s32 %v510, %v512
    %v514 = vrot.slane %v500, %v513
    %v515 = vcombine.high %v507, %v507
    %v516 = vcombine.high %v514, %v514
    %525 = vmatprep.subr.mxu0 %v226
    %526 = vmatpush1.msra.mxu0 %v225
    %527 = vmatprep.subr.mxu0 %v228
    %528 = vmatpush1.msra.mxu0 %v227
    %529 = vmatprep.subr.mxu0 %v230
    %530 = vmatpush1.msra.mxu0 %v229
    %531 = vmatprep.subr.mxu0 %v232
    %532 = vmatpush1.msra.mxu0 %v231
    %533 = vmatprep.subr.mxu0 %v234
    %534 = vmatpush1.msra.mxu0 %v233
    %535 = vmatprep.subr.mxu0 %v236
    %536 = vmatpush1.msra.mxu0 %v235
    %537 = vmatprep.subr.mxu0 %v238
    %538 = vmatpush1.msra.mxu0 %v237
    %539 = vmatprep.subr.mxu0 %v240
    %540 = vmatpush1.msra.mxu0 %v239
    %541 = vmatprep.subr.mxu0 %v242
    %542 = vmatpush1.msra.mxu0 %v241
    %543 = vmatprep.subr.mxu0 %v244
    %544 = vmatpush1.msra.mxu0 %v243
    %545 = vmatprep.subr.mxu0 %v246
    %546 = vmatpush1.msra.mxu0 %v245
    %547 = vmatprep.subr.mxu0 %v248
    %548 = vmatpush1.msra.mxu0 %v247
    %549 = vmatprep.subr.mxu0 %v250
    %550 = vmatpush1.msra.mxu0 %v249
    %551 = vmatprep.subr.mxu0 %v252
    %552 = vmatpush1.msra.mxu0 %v251
    %553 = vmatprep.subr.mxu0 %v254
    %554 = vmatpush1.msra.mxu0 %v253
    %555 = vmatprep.subr.mxu0 %v256
    %556 = vmatpush1.msra.mxu0 %v255
    %557 = vmatprep.subr.mxu0 %v258
    %558 = vmatpush1.msra.mxu0 %v257
    %559 = vmatprep.subr.mxu0 %v260
    %560 = vmatpush1.msra.mxu0 %v259
    %561 = vmatprep.subr.mxu0 %v262
    %562 = vmatpush1.msra.mxu0 %v261
    %563 = vmatprep.subr.mxu0 %v264
    %564 = vmatpush1.msra.mxu0 %v263
    %565 = vmatprep.subr.mxu0 %v266
    %566 = vmatpush1.msra.mxu0 %v265
    %567 = vmatprep.subr.mxu0 %v268
    %568 = vmatpush1.msra.mxu0 %v267
    %569 = vmatprep.subr.mxu0 %v270
    %570 = vmatpush1.msra.mxu0 %v269
    %571 = vmatprep.subr.mxu0 %v272
    %572 = vmatpush1.msra.mxu0 %v271
    %573 = vmatprep.subr.mxu0 %v274
    %574 = vmatpush1.msra.mxu0 %v273
    %575 = vmatprep.subr.mxu0 %v276
    %576 = vmatpush1.msra.mxu0 %v275
    %577 = vmatprep.subr.mxu0 %v278
    %578 = vmatpush1.msra.mxu0 %v277
    %579 = vmatprep.subr.mxu0 %v280
    %580 = vmatpush1.msra.mxu0 %v279
    %581 = vmatprep.subr.mxu0 %v282
    %582 = vmatpush1.msra.mxu0 %v281
    %583 = vmatprep.subr.mxu0 %v284
    %584 = vmatpush1.msra.mxu0 %v283
    %585 = vmatprep.subr.mxu0 %v286
    %586 = vmatpush1.msra.mxu0 %v285
    %587 = vmatprep.subr.mxu0 %v288
    %588 = vmatpush1.msra.mxu0 %v287
    %589 = vmatprep.mubr.f32.mxu0 %v498
    %590 = vmatmul.mubr.f32.gmra.mrb[0].mxu0 %v490
    %v591 = vpop.f32.mrb[0].mxu0
    %v592 = vadd.f32 0.0, %v591
    %v593 = vpop.f32.mrb[0].mxu0
    %v594 = vadd.f32 0.0, %v593
    %595 = vdwg.mxu0
    %596 = vmatprep.subr.mxu0 %v290
    %597 = vmatpush1.msra.mxu0 %v289
    %598 = vmatprep.subr.mxu0 %v292
    %599 = vmatpush1.msra.mxu0 %v291
    %600 = vmatprep.subr.mxu0 %v294
    %601 = vmatpush1.msra.mxu0 %v293
    %602 = vmatprep.subr.mxu0 %v296
    %603 = vmatpush1.msra.mxu0 %v295
    %604 = vmatprep.subr.mxu0 %v298
    %605 = vmatpush1.msra.mxu0 %v297
    %606 = vmatprep.subr.mxu0 %v300
    %607 = vmatpush1.msra.mxu0 %v299
    %608 = vmatprep.subr.mxu0 %v302
    %609 = vmatpush1.msra.mxu0 %v301
    %610 = vmatprep.subr.mxu0 %v304
    %611 = vmatpush1.msra.mxu0 %v303
    %612 = vmatprep.subr.mxu0 %v306
    %613 = vmatpush1.msra.mxu0 %v305
    %614 = vmatprep.subr.mxu0 %v308
    %615 = vmatpush1.msra.mxu0 %v307
    %616 = vmatprep.subr.mxu0 %v310
    %617 = vmatpush1.msra.mxu0 %v309
    %618 = vmatprep.subr.mxu0 %v312
    %619 = vmatpush1.msra.mxu0 %v311
    %620 = vmatprep.subr.mxu0 %v314
    %621 = vmatpush1.msra.mxu0 %v313
    %622 = vmatprep.subr.mxu0 %v316
    %623 = vmatpush1.msra.mxu0 %v315
    %624 = vmatprep.subr.mxu0 %v318
    %625 = vmatpush1.msra.mxu0 %v317
    %626 = vmatprep.subr.mxu0 %v320
    %627 = vmatpush1.msra.mxu0 %v319
    %628 = vmatprep.subr.mxu0 %v322
    %629 = vmatpush1.msra.mxu0 %v321
    %630 = vmatprep.subr.mxu0 %v324
    %631 = vmatpush1.msra.mxu0 %v323
    %632 = vmatprep.subr.mxu0 %v326
    %633 = vmatpush1.msra.mxu0 %v325
    %634 = vmatprep.subr.mxu0 %v328
    %635 = vmatpush1.msra.mxu0 %v327
    %636 = vmatprep.subr.mxu0 %v330
    %637 = vmatpush1.msra.mxu0 %v329
    %638 = vmatprep.subr.mxu0 %v332
    %639 = vmatpush1.msra.mxu0 %v331
    %640 = vmatprep.subr.mxu0 %v334
    %641 = vmatpush1.msra.mxu0 %v333
    %642 = vmatprep.subr.mxu0 %v336
    %643 = vmatpush1.msra.mxu0 %v335
    %644 = vmatprep.subr.mxu0 %v338
    %645 = vmatpush1.msra.mxu0 %v337
    %646 = vmatprep.subr.mxu0 %v340
    %647 = vmatpush1.msra.mxu0 %v339
    %648 = vmatprep.subr.mxu0 %v342
    %649 = vmatpush1.msra.mxu0 %v341
    %650 = vmatprep.subr.mxu0 %v344
    %651 = vmatpush1.msra.mxu0 %v343
    %652 = vmatprep.subr.mxu0 %v346
    %653 = vmatpush1.msra.mxu0 %v345
    %654 = vmatprep.subr.mxu0 %v348
    %655 = vmatpush1.msra.mxu0 %v347
    %656 = vmatprep.subr.mxu0 %v350
    %657 = vmatpush1.msra.mxu0 %v349
    %658 = vmatprep.subr.mxu0 %v352
    %659 = vmatpush1.msra.mxu0 %v351
    %660 = vmatprep.mubr.f32.mxu0 %v499
    %661 = vmatmul.mubr.f32.gmra.mrb[0].mxu0 %v497
    %v662 = vpop.f32.mrb[0].mxu0
    %v663 = vadd.f32 %v592, %v662
    %v664 = vpop.f32.mrb[0].mxu0
    %v665 = vadd.f32 %v594, %v664
    %666 = vdwg.mxu0
    %667 = vmatprep.subr.mxu0 %v354
    %668 = vmatpush1.msra.mxu0 %v353
    %669 = vmatprep.subr.mxu0 %v356
    %670 = vmatpush1.msra.mxu0 %v355
    %671 = vmatprep.subr.mxu0 %v358
    %672 = vmatpush1.msra.mxu0 %v357
    %673 = vmatprep.subr.mxu0 %v360
    %674 = vmatpush1.msra.mxu0 %v359
    %675 = vmatprep.subr.mxu0 %v362
    %676 = vmatpush1.msra.mxu0 %v361
    %677 = vmatprep.subr.mxu0 %v364
    %678 = vmatpush1.msra.mxu0 %v363
    %679 = vmatprep.subr.mxu0 %v366
    %680 = vmatpush1.msra.mxu0 %v365
    %681 = vmatprep.subr.mxu0 %v368
    %682 = vmatpush1.msra.mxu0 %v367
    %683 = vmatprep.subr.mxu0 %v370
    %684 = vmatpush1.msra.mxu0 %v369
    %685 = vmatprep.subr.mxu0 %v372
    %686 = vmatpush1.msra.mxu0 %v371
    %687 = vmatprep.subr.mxu0 %v374
    %688 = vmatpush1.msra.mxu0 %v373
    %689 = vmatprep.subr.mxu0 %v376
    %690 = vmatpush1.msra.mxu0 %v375
    %691 = vmatprep.subr.mxu0 %v378
    %692 = vmatpush1.msra.mxu0 %v377
    %693 = vmatprep.subr.mxu0 %v380
    %694 = vmatpush1.msra.mxu0 %v379
    %695 = vmatprep.subr.mxu0 %v382
    %696 = vmatpush1.msra.mxu0 %v381
    %697 = vmatprep.subr.mxu0 %v384
    %698 = vmatpush1.msra.mxu0 %v383
    %699 = vmatprep.subr.mxu0 %v386
    %700 = vmatpush1.msra.mxu0 %v385
    %701 = vmatprep.subr.mxu0 %v388
    %702 = vmatpush1.msra.mxu0 %v387
    %703 = vmatprep.subr.mxu0 %v390
    %704 = vmatpush1.msra.mxu0 %v389
    %705 = vmatprep.subr.mxu0 %v392
    %706 = vmatpush1.msra.mxu0 %v391
    %707 = vmatprep.subr.mxu0 %v394
    %708 = vmatpush1.msra.mxu0 %v393
    %709 = vmatprep.subr.mxu0 %v396
    %710 = vmatpush1.msra.mxu0 %v395
    %711 = vmatprep.subr.mxu0 %v398
    %712 = vmatpush1.msra.mxu0 %v397
    %713 = vmatprep.subr.mxu0 %v400
    %714 = vmatpush1.msra.mxu0 %v399
    %715 = vmatprep.subr.mxu0 %v402
    %716 = vmatpush1.msra.mxu0 %v401
    %717 = vmatprep.subr.mxu0 %v404
    %718 = vmatpush1.msra.mxu0 %v403
    %719 = vmatprep.subr.mxu0 %v406
    %720 = vmatpush1.msra.mxu0 %v405
    %721 = vmatprep.subr.mxu0 %v408
    %722 = vmatpush1.msra.mxu0 %v407
    %723 = vmatprep.subr.mxu0 %v410
    %724 = vmatpush1.msra.mxu0 %v409
    %725 = vmatprep.subr.mxu0 %v412
    %726 = vmatpush1.msra.mxu0 %v411
    %727 = vmatprep.subr.mxu0 %v414
    %728 = vmatpush1.msra.mxu0 %v413
    %729 = vmatprep.subr.mxu0 %v416
    %730 = vmatpush1.msra.mxu0 %v415
    %731 = vmatprep.mubr.f32.mxu0 %v515
    %732 = vmatmul.mubr.f32.gmra.mrb[0].mxu0 %v507
    %v733 = vpop.f32.mrb[0].mxu0
    %v734 = vadd.f32 %v663, %v733
    %v735 = vpop.f32.mrb[0].mxu0
    %v736 = vadd.f32 %v665, %v735
    %737 = vdwg.mxu0
    %738 = vmatprep.subr.mxu0 %v418
    %739 = vmatpush1.msra.mxu0 %v417
    %740 = vmatprep.subr.mxu0 %v420
    %741 = vmatpush1.msra.mxu0 %v419
    %742 = vmatprep.subr.mxu0 %v422
    %743 = vmatpush1.msra.mxu0 %v421
    %744 = vmatprep.subr.mxu0 %v424
    %745 = vmatpush1.msra.mxu0 %v423
    %746 = vmatprep.subr.mxu0 %v426
    %747 = vmatpush1.msra.mxu0 %v425
    %748 = vmatprep.subr.mxu0 %v428
    %749 = vmatpush1.msra.mxu0 %v427
    %750 = vmatprep.subr.mxu0 %v430
    %751 = vmatpush1.msra.mxu0 %v429
    %752 = vmatprep.subr.mxu0 %v432
    %753 = vmatpush1.msra.mxu0 %v431
    %754 = vmatprep.subr.mxu0 %v434
    %755 = vmatpush1.msra.mxu0 %v433
    %756 = vmatprep.subr.mxu0 %v436
    %757 = vmatpush1.msra.mxu0 %v435
    %758 = vmatprep.subr.mxu0 %v438
    %759 = vmatpush1.msra.mxu0 %v437
    %760 = vmatprep.subr.mxu0 %v440
    %761 = vmatpush1.msra.mxu0 %v439
    %762 = vmatprep.subr.mxu0 %v442
    %763 = vmatpush1.msra.mxu0 %v441
    %764 = vmatprep.subr.mxu0 %v444
    %765 = vmatpush1.msra.mxu0 %v443
    %766 = vmatprep.subr.mxu0 %v446
    %767 = vmatpush1.msra.mxu0 %v445
    %768 = vmatprep.subr.mxu0 %v448
    %769 = vmatpush1.msra.mxu0 %v447
    %770 = vmatprep.subr.mxu0 %v450
    %771 = vmatpush1.msra.mxu0 %v449
    %772 = vmatprep.subr.mxu0 %v452
    %773 = vmatpush1.msra.mxu0 %v451
    %774 = vmatprep.subr.mxu0 %v454
    %775 = vmatpush1.msra.mxu0 %v453
    %776 = vmatprep.subr.mxu0 %v456
    %777 = vmatpush1.msra.mxu0 %v455
    %778 = vmatprep.subr.mxu0 %v458
    %779 = vmatpush1.msra.mxu0 %v457
    %780 = vmatprep.subr.mxu0 %v460
    %781 = vmatpush1.msra.mxu0 %v459
    %782 = vmatprep.subr.mxu0 %v462
    %783 = vmatpush1.msra.mxu0 %v461
    %784 = vmatprep.subr.mxu0 %v464
    %785 = vmatpush1.msra.mxu0 %v463
    %786 = vmatprep.subr.mxu0 %v466
    %787 = vmatpush1.msra.mxu0 %v465
    %788 = vmatprep.subr.mxu0 %v468
    %789 = vmatpush1.msra.mxu0 %v467
    %790 = vmatprep.subr.mxu0 %v470
    %791 = vmatpush1.msra.mxu0 %v469
    %792 = vmatprep.subr.mxu0 %v472
    %793 = vmatpush1.msra.mxu0 %v471
    %794 = vmatprep.subr.mxu0 %v474
    %795 = vmatpush1.msra.mxu0 %v473
    %796 = vmatprep.subr.mxu0 %v476
    %797 = vmatpush1.msra.mxu0 %v475
    %798 = vmatprep.subr.mxu0 %v478
    %799 = vmatpush1.msra.mxu0 %v477
    %800 = vmatprep.subr.mxu0 %v480
    %801 = vmatpush1.msra.mxu0 %v479
    %802 = vmatprep.mubr.f32.mxu0 %v516
    %803 = vmatmul.mubr.f32.gmra.mrb[0].mxu0 %v514
    %v804 = vpop.f32.mrb[0].mxu0
    %v805 = vadd.f32 %v734, %v804
    %v806 = vpop.f32.mrb[0].mxu0
    %v807 = vadd.f32 %v736, %v806
    %808 = vdwg.mxu0
    %v811 = vcombine.low %v805, %v807
    %v813 = vunpack.c.l.s4 1983009808
    %v814 = vunpack.c.0.s8 %v813
    %v815 = vlaneseq
    %v816 = vshrl.u32 %v815, 7
    %v817 = vsub.s32 %v814, %v816
    %v818 = vrot.slane %v811, %v817
    %v820 = vadd.f32 %v222, %v818
    %821 = vst [vmem:[#allocation12] sm:$0xf] %v820
    // Predicated region
    $region46: #{tpu_custom_call.1} parent=1 // pred_check
      _
    $region47: #{tpu_custom_call.1} parent=1 // pred_check_branch
      %823 = sbr.rel (0) target = $region49
    $region48: #{tpu_custom_call.1} parent=1 // pred_region
      %s825 = ssub.s32 64, 64
      %826 = vsyncadd [#allocation4], %s825
      %s828 = sshll.u32 [#allocation12], 4
      %s829 = int_to_ptr.vmem [resolvable:$true] %s828
      %831 = dma.vmem_to_hbm [thread:$0]  %s829, 64, %s5, [#allocation4]
    $region49: #{tpu_custom_call.1} parent=1 // pred_fallthru
      _
    // Predicated region
    $region50: #{tpu_custom_call.1} parent=1 // pred_check
      _
    $region51: #{tpu_custom_call.1} parent=1 // pred_check_branch
      %833 = sbr.rel (0) target = $region53
    $region52: #{tpu_custom_call.1} parent=1 // pred_region
      %834 = dma.done [#allocation4], 64
    $region53: #{tpu_custom_call.1} parent=1 // pred_fallthru
      _
    %835 = vsyncpa [#allocation3], 1
    %836 = vsyncpa [#allocation8], 1
    %837 = vsyncpa [#allocation11], 1
    %838 = vsyncpa [#allocation4], 1
    %839 = vsyncpa [#allocation5], 1

</llo_original>
